<compile_context>
chip_gen: v6e
topology: v6e:2x2x1
jax: 0.10.0
libtpu: 0.0.40
codegen_flags: <defaults>
</compile_context>

<pallas_src>
import functools

import jax
import jax.numpy as jnp
from jax.experimental import pallas as pl
from jax.experimental.pallas import tpu as pltpu


def _adjust_sharpness_kernel(x_ref, o_ref, *, factor, plane_h):
    # x_ref / o_ref: VMEM (T*H, W) -- T stacked image planes of height plane_h.
    x = x_ref[...].astype(jnp.float32)
    R, W = x.shape
    H = plane_h

    # Separable 3x3 smoothing conv via XLU rotations. pltpu.roll shifts must be
    # non-negative, so "shift by -1" is written as "shift by size - 1".
    v = pltpu.roll(x, 1, 0) + x + pltpu.roll(x, R - 1, 0)   # vertical 1-1-1
    h = pltpu.roll(v, 1, 1) + v + pltpu.roll(v, W - 1, 1)   # horizontal 1-1-1
    # weights: 1 everywhere, 5 in the center -> 3x3 sum has x once, add 4*x.
    blur = (h + 4.0 * x) * (1.0 / 13.0)

    # Interior mask per plane: border rows/cols keep the original pixels, which
    # also absorbs all roll wrap-around (plane seams and block edges).
    row = jax.lax.broadcasted_iota(jnp.int32, (R, W), 0) % H
    col = jax.lax.broadcasted_iota(jnp.int32, (R, W), 1)
    interior = (row >= 1) & (row <= H - 2) & (col >= 1) & (col <= W - 2)
    blurred = jnp.where(interior, blur, x)

    f = jnp.float32(factor)
    out = jnp.clip(f * x + (1.0 - f) * blurred, 0.0, 1.0)
    o_ref[...] = out.astype(o_ref.dtype)


def _choose_tile_planes(BC, H, W, itemsize, target_bytes=2 << 20):
    """Largest divisor T of BC whose (T*H, W) tile is <= ~2 MiB and sublane-legal."""
    best = BC  # fallback: whole array in one block
    for t in range(BC, 0, -1):
        if BC % t:
            continue
        if (t * H) % 8 != 0 and t != BC:
            continue  # block second-to-last dim must be /8 or the full extent
        if t * H * W * itemsize <= target_bytes:
            best = t
            break
    return best


@functools.partial(jax.jit, static_argnames=("factor", "plane_h", "tile_planes"))
def _adjust_sharpness_call(x2d, *, factor, plane_h, tile_planes):
    R_total, W = x2d.shape
    R = tile_planes * plane_h
    kernel = functools.partial(
        _adjust_sharpness_kernel, factor=float(factor), plane_h=plane_h)
    return pl.pallas_call(
        kernel,
        out_shape=jax.ShapeDtypeStruct((R_total, W), x2d.dtype),
        grid=(R_total // R,),
        in_specs=[pl.BlockSpec((R, W), lambda i: (i, 0))],
        out_specs=pl.BlockSpec((R, W), lambda i: (i, 0)),
        compiler_params=pltpu.CompilerParams(
            dimension_semantics=("parallel",)),
    )(x2d)


def adjust_sharpness_pallas(img, factor, tile_planes=None):
    """Equivalent of torchvision.transforms.RandomAdjustSharpness(factor, p=1)(img)."""
    B, C, H, W = img.shape
    BC = B * C
    x2d = img.reshape(BC * H, W)
    if tile_planes is None:
        tile_planes = _choose_tile_planes(BC, H, W, img.dtype.itemsize)
    out = _adjust_sharpness_call(
        x2d, factor=float(factor), plane_h=H, tile_planes=int(tile_planes))
    return out.reshape(B, C, H, W)


class PerformAtMostN:
    """JAX port of PerformAtMostN (randomness drawn eagerly from a PRNG key)."""

    def __init__(self, transforms, prob, n):
        self.n = n
        self.transforms = transforms
        self.prob = prob

    def __call__(self, batch, key):
        k1, k2, k3 = jax.random.split(key, 3)
        if self.prob < float(jax.random.uniform(k1, ())):
            return batch
        # NOTE: with n == 1 (as MyRandomAdjustSharpness constructs it),
        # randperm(1)[0] == 0, so no transform is ever applied — this quirk of
        # the original PyTorch code is reproduced faithfully here.
        n_transforms = int(jax.random.permutation(k2, self.n)[0])
        idxs = jax.random.permutation(k3, len(self.transforms))[:n_transforms]
        for i in idxs:
            batch = self.transforms[int(i)](batch)
        return batch


class MyRandomAdjustSharpness:
    def __init__(self, start, end, n, prob=0.5):
        self.n = n
        self.sharpness_factors = jnp.linspace(start, end, n)
        transforms = [
            functools.partial(adjust_sharpness_pallas, factor=float(f))
            for f in self.sharpness_factors
        ]
        self.adj_sharpness_transforms = PerformAtMostN(transforms, prob, n=1)

    def __call__(self, batch, key):
        return self.adj_sharpness_transforms(batch, key)


def _adjust_sharpness_ref(img, factor):
    """Pure-JAX reference mirroring torchvision F.adjust_sharpness."""
    B, C, H, W = img.shape
    k = jnp.ones((3, 3), jnp.float32).at[1, 1].set(5.0)
    k = (k / jnp.sum(k)).reshape(1, 1, 3, 3)
    x = img.reshape(B * C, 1, H, W).astype(jnp.float32)
    blurred_int = jax.lax.conv_general_dilated(
        x, k, window_strides=(1, 1), padding="VALID",
        dimension_numbers=("NCHW", "OIHW", "NCHW"))
    blurred = x.at[:, :, 1:-1, 1:-1].set(blurred_int)
    out = jnp.clip(factor * x + (1.0 - factor) * blurred, 0.0, 1.0)
    return out.reshape(B, C, H, W).astype(img.dtype)


if __name__ == "__main__":
    key = jax.random.PRNGKey(0)
    x = jax.random.uniform(key, (2, 4, 16, 16), dtype=jnp.float32)
    factor = 1.7
    y_ref = _adjust_sharpness_ref(x, factor)

    # Default tiling (all 8 planes in one block, grid=(1,)).
    y = jax.block_until_ready(adjust_sharpness_pallas(x, factor))
    assert y.shape == x.shape and y.dtype == x.dtype
    assert jnp.allclose(y, y_ref, rtol=1e-5, atol=1e-5), float(
        jnp.max(jnp.abs(y - y_ref)))

    # Also exercise a multi-step grid (2 planes per block -> grid=(4,)).
    y2 = jax.block_until_ready(adjust_sharpness_pallas(x, factor, tile_planes=2))
    assert jnp.allclose(y2, y_ref, rtol=1e-5, atol=1e-5), float(
        jnp.max(jnp.abs(y2 - y_ref)))

    # Full module forward (faithful to the PyTorch control flow).
    module = MyRandomAdjustSharpness(start=0.5, end=2.0, n=4, prob=0.5)
    out_module = jax.block_until_ready(module(x, jax.random.PRNGKey(1)))
    assert out_module.shape == x.shape and out_module.dtype == x.dtype

    print("KERNEL_OK")
</pallas_src>

<mosaic_0001>
module attributes {stable_mosaic.version = 11 : i64} {
  func.func @_adjust_sharpness_kernel(%arg0: i32, %arg1: memref<128x16xf32, #tpu.memory_space<vmem>>, %arg2: memref<128x16xf32, #tpu.memory_space<vmem>>) attributes {dimension_semantics = [#tpu.dimension_semantics<parallel>], iteration_bounds = array<i64: 1>, scalar_prefetch = 0 : i64, scratch_operands = 0 : i64, tpu.core_type = #tpu.core_type<tc>, window_params = [{transform_indices = @transform_0, window_bounds = array<i64: 128, 16>}, {transform_indices = @transform_1, window_bounds = array<i64: 128, 16>}]} {
    %c0 = arith.constant 0 : index
    %c0_0 = arith.constant 0 : index
    %0 = vector.load %arg1[%c0, %c0_0] : memref<128x16xf32, #tpu.memory_space<vmem>>, vector<128x16xf32>
    %c1_i32 = arith.constant 1 : i32
    %1 = tpu.dynamic_rotate %0 by %c1_i32 dim 0 : vector<128x16xf32>, i32 -> vector<128x16xf32>
    %2 = arith.addf %1, %0 : vector<128x16xf32>
    %c127_i32 = arith.constant 127 : i32
    %3 = tpu.dynamic_rotate %0 by %c127_i32 dim 0 : vector<128x16xf32>, i32 -> vector<128x16xf32>
    %4 = arith.addf %2, %3 : vector<128x16xf32>
    %c1_i32_1 = arith.constant 1 : i32
    %5 = tpu.dynamic_rotate %4 by %c1_i32_1 dim 1 : vector<128x16xf32>, i32 -> vector<128x16xf32>
    %6 = arith.addf %5, %4 : vector<128x16xf32>
    %c15_i32 = arith.constant 15 : i32
    %7 = tpu.dynamic_rotate %4 by %c15_i32 dim 1 : vector<128x16xf32>, i32 -> vector<128x16xf32>
    %8 = arith.addf %6, %7 : vector<128x16xf32>
    %cst = arith.constant 4.000000e+00 : f32
    %9 = vector.broadcast %cst : f32 to vector<128x16xf32>
    %10 = arith.mulf %9, %0 : vector<128x16xf32>
    %11 = arith.addf %8, %10 : vector<128x16xf32>
    %cst_2 = arith.constant 0.0769230798 : f32
    %12 = vector.broadcast %cst_2 : f32 to vector<128x16xf32>
    %13 = arith.mulf %11, %12 : vector<128x16xf32>
    %14 = tpu.iota {dimensions = array<i32: 0>} : vector<128x16xi32>
    %c16_i32 = arith.constant 16 : i32
    %c0_i32 = arith.constant 0 : i32
    %15 = arith.cmpi eq, %c16_i32, %c0_i32 : i32
    %c1_i32_3 = arith.constant 1 : i32
    %16 = arith.select %15, %c1_i32_3, %c16_i32 : i32
    %17 = vector.broadcast %16 : i32 to vector<128x16xi32>
    %18 = arith.remsi %14, %17 : vector<128x16xi32>
    %c0_i32_4 = arith.constant 0 : i32
    %19 = vector.broadcast %c0_i32_4 : i32 to vector<128x16xi32>
    %20 = arith.cmpi ne, %18, %19 : vector<128x16xi32>
    %c0_i32_5 = arith.constant 0 : i32
    %21 = vector.broadcast %c0_i32_5 : i32 to vector<128x16xi32>
    %22 = arith.cmpi slt, %18, %21 : vector<128x16xi32>
    %c0_i32_6 = arith.constant 0 : i32
    %23 = arith.cmpi slt, %16, %c0_i32_6 : i32
    %24 = vector.broadcast %23 : i1 to vector<128x16xi1>
    %25 = vector.broadcast %24 : vector<128x16xi1> to vector<128x16xi1>
    %26 = arith.xori %22, %25 : vector<128x16xi1>
    %27 = arith.andi %26, %20 : vector<128x16xi1>
    %28 = vector.broadcast %16 : i32 to vector<128x16xi32>
    %29 = arith.addi %18, %28 : vector<128x16xi32>
    %30 = arith.select %27, %29, %18 : vector<128x16xi1>, vector<128x16xi32>
    %31 = tpu.iota {dimensions = array<i32: 1>} : vector<128x16xi32>
    %c1_i32_7 = arith.constant 1 : i32
    %32 = vector.broadcast %c1_i32_7 : i32 to vector<128x16xi32>
    %33 = arith.cmpi sge, %30, %32 : vector<128x16xi32>
    %c14_i32 = arith.constant 14 : i32
    %34 = vector.broadcast %c14_i32 : i32 to vector<128x16xi32>
    %35 = arith.cmpi sle, %30, %34 : vector<128x16xi32>
    %36 = arith.andi %33, %35 : vector<128x16xi1>
    %c1_i32_8 = arith.constant 1 : i32
    %37 = vector.broadcast %c1_i32_8 : i32 to vector<128x16xi32>
    %38 = arith.cmpi sge, %31, %37 : vector<128x16xi32>
    %39 = arith.andi %36, %38 : vector<128x16xi1>
    %c14_i32_9 = arith.constant 14 : i32
    %40 = vector.broadcast %c14_i32_9 : i32 to vector<128x16xi32>
    %41 = arith.cmpi sle, %31, %40 : vector<128x16xi32>
    %42 = arith.andi %39, %41 : vector<128x16xi1>
    %43 = arith.select %42, %13, %0 : vector<128x16xi1>, vector<128x16xf32>
    %cst_10 = arith.constant 1.700000e+00 : f32
    %44 = vector.broadcast %cst_10 : f32 to vector<128x16xf32>
    %45 = arith.mulf %44, %0 : vector<128x16xf32>
    %cst_11 = arith.constant 1.000000e+00 : f32
    %cst_12 = arith.constant 1.700000e+00 : f32
    %46 = arith.subf %cst_11, %cst_12 : f32
    %47 = vector.broadcast %46 : f32 to vector<128x16xf32>
    %48 = arith.mulf %47, %43 : vector<128x16xf32>
    %49 = arith.addf %45, %48 : vector<128x16xf32>
    %cst_13 = arith.constant 0.000000e+00 : f32
    %cst_14 = arith.constant 1.000000e+00 : f32
    %50 = vector.broadcast %cst_13 : f32 to vector<128x16xf32>
    %51 = arith.maximumf %50, %49 : vector<128x16xf32>
    %52 = vector.broadcast %cst_14 : f32 to vector<128x16xf32>
    %53 = arith.minimumf %52, %51 : vector<128x16xf32>
    %c0_15 = arith.constant 0 : index
    %c0_16 = arith.constant 0 : index
    %54 = vector.load %arg2[%c0_15, %c0_16] : memref<128x16xf32, #tpu.memory_space<vmem>>, vector<128x16xf32>
    tpu.vector_store %arg2[%c0_15, %c0_16], %53 {strides = array<i32>} : memref<128x16xf32, #tpu.memory_space<vmem>>, vector<128x16xf32>,
    return
  }
  func.func @transform_0(%arg0: i32) -> (i32, i32) {
    %c0_i32 = arith.constant 0 : i32
    %c0_i32_0 = arith.constant 0 : i32
    return %arg0, %c0_i32 : i32, i32
  }
  func.func @transform_1(%arg0: i32) -> (i32, i32) {
    %c0_i32 = arith.constant 0 : i32
    %c0_i32_0 = arith.constant 0 : i32
    return %arg0, %c0_i32 : i32, i32
  }
}

</mosaic_0001>

<llo_original>
// kernel: _adjust_sharpness_call.1
$region0: #{_adjust_sharpness_call.1}
  #allocation0 [shape = 'u32[]', space=smem, size = 0x4, offset = 0x4, fixed_abs, tag = 'smem constant byte address 0x4 - core index']
  #allocation1 [shape = 'u32[144,128]{1,0:T(1,128)}', space=vmem, size = 0x12000, scoped, tag = 'internal scratch']
  %s0 = inlined_call_operand.vmem [shape: f32[128,16], index: 0, kind: input, shape index: {}]
  %s1 = inlined_call_operand.vmem [shape: f32[128,16], index: 1, kind: output, shape index: {}]
  %s2 = sld [smem:[#allocation0]]
  $region14: #{_adjust_sharpness_call.1} parent=0
    _
  %s4 = ssub.s32 1, %s2
  %s5 = scalar_select 0, %s4, %s2
  // Predicated region
  $region2: #{_adjust_sharpness_call.1} parent=0 // pred_check
    _
  $region3: #{_adjust_sharpness_call.1} parent=0 // pred_check_branch
    %7 = sbr.rel (0) target = $region5
  $region4: #{_adjust_sharpness_call.1} parent=0 // pred_region
    _
  $region5: #{_adjust_sharpness_call.1} parent=0 // pred_fallthru
    _
  %v8 = vld [vmem:[%s0] sm:$0xff]
  %v9 = vld [vmem:[%s0 + $0x8] sm:$0xff]
  %v10 = vld [vmem:[%s0 + $0x10] sm:$0xff]
  %v11 = vld [vmem:[%s0 + $0x18] sm:$0xff]
  %v12 = vld [vmem:[%s0 + $0x20] sm:$0xff]
  %v13 = vld [vmem:[%s0 + $0x28] sm:$0xff]
  %v14 = vld [vmem:[%s0 + $0x30] sm:$0xff]
  %v15 = vld [vmem:[%s0 + $0x38] sm:$0xff]
  %v16 = vld [vmem:[%s0 + $0x40] sm:$0xff]
  %v17 = vld [vmem:[%s0 + $0x48] sm:$0xff]
  %v18 = vld [vmem:[%s0 + $0x50] sm:$0xff]
  %v19 = vld [vmem:[%s0 + $0x58] sm:$0xff]
  %v20 = vld [vmem:[%s0 + $0x60] sm:$0xff]
  %v21 = vld [vmem:[%s0 + $0x68] sm:$0xff]
  %v22 = vld [vmem:[%s0 + $0x70] sm:$0xff]
  %v23 = vld [vmem:[%s0 + $0x78] sm:$0xff]
  %v24 = vrot.slane %v8, 7
  %v25 = vrot.slane %v9, 7
  %v26 = vrot.slane %v10, 7
  %v27 = vrot.slane %v11, 7
  %v28 = vrot.slane %v12, 7
  %v29 = vrot.slane %v13, 7
  %v30 = vrot.slane %v14, 7
  %v31 = vrot.slane %v15, 7
  %v32 = vrot.slane %v16, 7
  %v33 = vrot.slane %v17, 7
  %v34 = vrot.slane %v18, 7
  %v35 = vrot.slane %v19, 7
  %v36 = vrot.slane %v20, 7
  %v37 = vrot.slane %v21, 7
  %v38 = vrot.slane %v22, 7
  %v39 = vrot.slane %v23, 7
  %v40 = vlaneseq
  %v41 = vshrl.u32 %v40, 7
  %vm42 = vcmp.lt.s32.totalorder %v41, 1
  %v43 = vsel %vm42, %v38, %v39
  %v44 = vsel %vm42, %v37, %v38
  %v45 = vsel %vm42, %v36, %v37
  %v46 = vsel %vm42, %v35, %v36
  %v47 = vsel %vm42, %v34, %v35
  %v48 = vsel %vm42, %v33, %v34
  %v49 = vsel %vm42, %v32, %v33
  %v50 = vsel %vm42, %v31, %v32
  %v51 = vsel %vm42, %v30, %v31
  %v52 = vsel %vm42, %v29, %v30
  %v53 = vsel %vm42, %v28, %v29
  %v54 = vsel %vm42, %v27, %v28
  %v55 = vsel %vm42, %v26, %v27
  %v56 = vsel %vm42, %v25, %v26
  %v57 = vsel %vm42, %v24, %v25
  %v58 = vsel %vm42, %v39, %v24
  %v59 = vadd.f32 %v58, %v8
  %v60 = vadd.f32 %v57, %v9
  %v61 = vadd.f32 %v56, %v10
  %v62 = vadd.f32 %v55, %v11
  %v63 = vadd.f32 %v54, %v12
  %v64 = vadd.f32 %v53, %v13
  %v65 = vadd.f32 %v52, %v14
  %v66 = vadd.f32 %v51, %v15
  %v67 = vadd.f32 %v50, %v16
  %v68 = vadd.f32 %v49, %v17
  %v69 = vadd.f32 %v48, %v18
  %v70 = vadd.f32 %v47, %v19
  %v71 = vadd.f32 %v46, %v20
  %v72 = vadd.f32 %v45, %v21
  %v73 = vadd.f32 %v44, %v22
  %v74 = vadd.f32 %v43, %v23
  %v75 = vrot.slane %v8, 1
  %v76 = vrot.slane %v9, 1
  %v77 = vrot.slane %v10, 1
  %v78 = vrot.slane %v11, 1
  %v79 = vrot.slane %v12, 1
  %v80 = vrot.slane %v13, 1
  %v81 = vrot.slane %v14, 1
  %v82 = vrot.slane %v15, 1
  %v83 = vrot.slane %v16, 1
  %v84 = vrot.slane %v17, 1
  %v85 = vrot.slane %v18, 1
  %v86 = vrot.slane %v19, 1
  %v87 = vrot.slane %v20, 1
  %v88 = vrot.slane %v21, 1
  %v89 = vrot.slane %v22, 1
  %v90 = vrot.slane %v23, 1
  %vm91 = vcmp.lt.s32.totalorder %v41, 7
  %v92 = vsel %vm91, %v89, %v90
  %v93 = vsel %vm91, %v88, %v89
  %v94 = vsel %vm91, %v87, %v88
  %v95 = vsel %vm91, %v86, %v87
  %v96 = vsel %vm91, %v85, %v86
  %v97 = vsel %vm91, %v84, %v85
  %v98 = vsel %vm91, %v83, %v84
  %v99 = vsel %vm91, %v82, %v83
  %v100 = vsel %vm91, %v81, %v82
  %v101 = vsel %vm91, %v80, %v81
  %v102 = vsel %vm91, %v79, %v80
  %v103 = vsel %vm91, %v78, %v79
  %v104 = vsel %vm91, %v77, %v78
  %v105 = vsel %vm91, %v76, %v77
  %v106 = vsel %vm91, %v75, %v76
  %v107 = vsel %vm91, %v90, %v75
  %v108 = vadd.f32 %v59, %v106
  %v109 = vadd.f32 %v60, %v105
  %v110 = vadd.f32 %v61, %v104
  %v111 = vadd.f32 %v62, %v103
  %v112 = vadd.f32 %v63, %v102
  %v113 = vadd.f32 %v64, %v101
  %v114 = vadd.f32 %v65, %v100
  %v115 = vadd.f32 %v66, %v99
  %v116 = vadd.f32 %v67, %v98
  %v117 = vadd.f32 %v68, %v97
  %v118 = vadd.f32 %v69, %v96
  %v119 = vadd.f32 %v70, %v95
  %v120 = vadd.f32 %v71, %v94
  %v121 = vadd.f32 %v72, %v93
  %v122 = vadd.f32 %v73, %v92
  %v123 = vadd.f32 %v74, %v107
  %vm124 = vcmask 1047680
  %125 = vrot.lane.b32.xlu0 %v108, 16
  %v126 = vpop.permute.xlu0 %125
  %v127 = vsel %vm124, %v126, %v108
  %128 = vrot.lane.b32.xlu0 %v109, 16
  %v129 = vpop.permute.xlu0 %128
  %v130 = vsel %vm124, %v129, %v109
  %131 = vrot.lane.b32.xlu0 %v110, 16
  %v132 = vpop.permute.xlu0 %131
  %v133 = vsel %vm124, %v132, %v110
  %134 = vrot.lane.b32.xlu0 %v111, 16
  %v135 = vpop.permute.xlu0 %134
  %v136 = vsel %vm124, %v135, %v111
  %137 = vrot.lane.b32.xlu0 %v112, 16
  %v138 = vpop.permute.xlu0 %137
  %v139 = vsel %vm124, %v138, %v112
  %140 = vrot.lane.b32.xlu0 %v113, 16
  %v141 = vpop.permute.xlu0 %140
  %v142 = vsel %vm124, %v141, %v113
  %143 = vrot.lane.b32.xlu0 %v114, 16
  %v144 = vpop.permute.xlu0 %143
  %v145 = vsel %vm124, %v144, %v114
  %146 = vrot.lane.b32.xlu0 %v115, 16
  %v147 = vpop.permute.xlu0 %146
  %v148 = vsel %vm124, %v147, %v115
  %149 = vrot.lane.b32.xlu0 %v116, 16
  %v150 = vpop.permute.xlu0 %149
  %v151 = vsel %vm124, %v150, %v116
  %152 = vrot.lane.b32.xlu0 %v117, 16
  %v153 = vpop.permute.xlu0 %152
  %v154 = vsel %vm124, %v153, %v117
  %155 = vrot.lane.b32.xlu0 %v118, 16
  %v156 = vpop.permute.xlu0 %155
  %v157 = vsel %vm124, %v156, %v118
  %158 = vrot.lane.b32.xlu0 %v119, 16
  %v159 = vpop.permute.xlu0 %158
  %v160 = vsel %vm124, %v159, %v119
  %161 = vrot.lane.b32.xlu0 %v120, 16
  %v162 = vpop.permute.xlu0 %161
  %v163 = vsel %vm124, %v162, %v120
  %164 = vrot.lane.b32.xlu0 %v121, 16
  %v165 = vpop.permute.xlu0 %164
  %v166 = vsel %vm124, %v165, %v121
  %167 = vrot.lane.b32.xlu0 %v122, 16
  %v168 = vpop.permute.xlu0 %167
  %v169 = vsel %vm124, %v168, %v122
  %170 = vrot.lane.b32.xlu0 %v123, 16
  %v171 = vpop.permute.xlu0 %170
  %v172 = vsel %vm124, %v171, %v123
  %173 = vrot.lane.b32.xlu0 %v127, 16
  %v174 = vpop.permute.xlu0 %173
  %175 = vrot.lane.b32.xlu0 %v130, 16
  %v176 = vpop.permute.xlu0 %175
  %177 = vrot.lane.b32.xlu0 %v133, 16
  %v178 = vpop.permute.xlu0 %177
  %179 = vrot.lane.b32.xlu0 %v136, 16
  %v180 = vpop.permute.xlu0 %179
  %181 = vrot.lane.b32.xlu0 %v139, 16
  %v182 = vpop.permute.xlu0 %181
  %183 = vrot.lane.b32.xlu0 %v142, 16
  %v184 = vpop.permute.xlu0 %183
  %185 = vrot.lane.b32.xlu0 %v145, 16
  %v186 = vpop.permute.xlu0 %185
  %187 = vrot.lane.b32.xlu0 %v148, 16
  %v188 = vpop.permute.xlu0 %187
  %189 = vrot.lane.b32.xlu0 %v151, 16
  %v190 = vpop.permute.xlu0 %189
  %191 = vrot.lane.b32.xlu0 %v154, 16
  %v192 = vpop.permute.xlu0 %191
  %193 = vrot.lane.b32.xlu0 %v157, 16
  %v194 = vpop.permute.xlu0 %193
  %195 = vrot.lane.b32.xlu0 %v160, 16
  %v196 = vpop.permute.xlu0 %195
  %197 = vrot.lane.b32.xlu0 %v163, 16
  %v198 = vpop.permute.xlu0 %197
  %199 = vrot.lane.b32.xlu0 %v166, 16
  %v200 = vpop.permute.xlu0 %199
  %201 = vrot.lane.b32.xlu0 %v169, 16
  %v202 = vpop.permute.xlu0 %201
  %203 = vrot.lane.b32.xlu0 %v172, 16
  %v204 = vpop.permute.xlu0 %203
  %v205 = vsel %vm124, %v174, %v108
  %v206 = vsel %vm124, %v176, %v109
  %v207 = vsel %vm124, %v178, %v110
  %v208 = vsel %vm124, %v180, %v111
  %v209 = vsel %vm124, %v182, %v112
  %v210 = vsel %vm124, %v184, %v113
  %v211 = vsel %vm124, %v186, %v114
  %v212 = vsel %vm124, %v188, %v115
  %v213 = vsel %vm124, %v190, %v116
  %v214 = vsel %vm124, %v192, %v117
  %v215 = vsel %vm124, %v194, %v118
  %v216 = vsel %vm124, %v196, %v119
  %v217 = vsel %vm124, %v198, %v120
  %v218 = vsel %vm124, %v200, %v121
  %v219 = vsel %vm124, %v202, %v122
  %v220 = vsel %vm124, %v204, %v123
  %237 = vrot.lane.b32.xlu0 %v108, 15
  %v238 = vpop.permute.xlu0 %237
  %239 = vrot.lane.b32.xlu0 %v109, 15
  %v240 = vpop.permute.xlu0 %239
  %241 = vrot.lane.b32.xlu0 %v110, 15
  %v242 = vpop.permute.xlu0 %241
  %243 = vrot.lane.b32.xlu0 %v111, 15
  %v244 = vpop.permute.xlu0 %243
  %245 = vrot.lane.b32.xlu0 %v112, 15
  %v246 = vpop.permute.xlu0 %245
  %247 = vrot.lane.b32.xlu0 %v113, 15
  %v248 = vpop.permute.xlu0 %247
  %249 = vrot.lane.b32.xlu0 %v114, 15
  %v250 = vpop.permute.xlu0 %249
  %251 = vrot.lane.b32.xlu0 %v115, 15
  %v252 = vpop.permute.xlu0 %251
  %253 = vrot.lane.b32.xlu0 %v116, 15
  %v254 = vpop.permute.xlu0 %253
  %255 = vrot.lane.b32.xlu0 %v117, 15
  %v256 = vpop.permute.xlu0 %255
  %257 = vrot.lane.b32.xlu0 %v118, 15
  %v258 = vpop.permute.xlu0 %257
  %259 = vrot.lane.b32.xlu0 %v119, 15
  %v260 = vpop.permute.xlu0 %259
  %261 = vrot.lane.b32.xlu0 %v120, 15
  %v262 = vpop.permute.xlu0 %261
  %263 = vrot.lane.b32.xlu0 %v121, 15
  %v264 = vpop.permute.xlu0 %263
  %265 = vrot.lane.b32.xlu0 %v122, 15
  %v266 = vpop.permute.xlu0 %265
  %267 = vrot.lane.b32.xlu0 %v123, 15
  %v268 = vpop.permute.xlu0 %267
  %v285 = vadd.f32 %v205, %v238
  %v286 = vadd.f32 %v206, %v240
  %v287 = vadd.f32 %v207, %v242
  %v288 = vadd.f32 %v208, %v244
  %v289 = vadd.f32 %v209, %v246
  %v290 = vadd.f32 %v210, %v248
  %v291 = vadd.f32 %v211, %v250
  %v292 = vadd.f32 %v212, %v252
  %v293 = vadd.f32 %v213, %v254
  %v294 = vadd.f32 %v214, %v256
  %v295 = vadd.f32 %v215, %v258
  %v296 = vadd.f32 %v216, %v260
  %v297 = vadd.f32 %v217, %v262
  %v298 = vadd.f32 %v218, %v264
  %v299 = vadd.f32 %v219, %v266
  %v300 = vadd.f32 %v220, %v268
  %317 = vrot.lane.b32.xlu0 %v205, 14
  %v318 = vpop.permute.xlu0 %317
  %319 = vrot.lane.b32.xlu0 %v206, 14
  %v320 = vpop.permute.xlu0 %319
  %321 = vrot.lane.b32.xlu0 %v207, 14
  %v322 = vpop.permute.xlu0 %321
  %323 = vrot.lane.b32.xlu0 %v208, 14
  %v324 = vpop.permute.xlu0 %323
  %325 = vrot.lane.b32.xlu0 %v209, 14
  %v326 = vpop.permute.xlu0 %325
  %327 = vrot.lane.b32.xlu0 %v210, 14
  %v328 = vpop.permute.xlu0 %327
  %329 = vrot.lane.b32.xlu0 %v211, 14
  %v330 = vpop.permute.xlu0 %329
  %331 = vrot.lane.b32.xlu0 %v212, 14
  %v332 = vpop.permute.xlu0 %331
  %333 = vrot.lane.b32.xlu0 %v213, 14
  %v334 = vpop.permute.xlu0 %333
  %335 = vrot.lane.b32.xlu0 %v214, 14
  %v336 = vpop.permute.xlu0 %335
  %337 = vrot.lane.b32.xlu0 %v215, 14
  %v338 = vpop.permute.xlu0 %337
  %339 = vrot.lane.b32.xlu0 %v216, 14
  %v340 = vpop.permute.xlu0 %339
  %341 = vrot.lane.b32.xlu0 %v217, 14
  %v342 = vpop.permute.xlu0 %341
  %343 = vrot.lane.b32.xlu0 %v218, 14
  %v344 = vpop.permute.xlu0 %343
  %345 = vrot.lane.b32.xlu0 %v219, 14
  %v346 = vpop.permute.xlu0 %345
  %347 = vrot.lane.b32.xlu0 %v220, 14
  %v348 = vpop.permute.xlu0 %347
  %v365 = vadd.f32 %v285, %v318
  %v366 = vadd.f32 %v286, %v320
  %v367 = vadd.f32 %v287, %v322
  %v368 = vadd.f32 %v288, %v324
  %v369 = vadd.f32 %v289, %v326
  %v370 = vadd.f32 %v290, %v328
  %v371 = vadd.f32 %v291, %v330
  %v372 = vadd.f32 %v292, %v332
  %v373 = vadd.f32 %v293, %v334
  %v374 = vadd.f32 %v294, %v336
  %v375 = vadd.f32 %v295, %v338
  %v376 = vadd.f32 %v296, %v340
  %v377 = vadd.f32 %v297, %v342
  %v378 = vadd.f32 %v298, %v344
  %v379 = vadd.f32 %v299, %v346
  %v380 = vadd.f32 %v300, %v348
  %v381 = vmul.f32 %v8, 4.0
  %v382 = vmul.f32 %v9, 4.0
  %v383 = vmul.f32 %v10, 4.0
  %v384 = vmul.f32 %v11, 4.0
  %v385 = vmul.f32 %v12, 4.0
  %v386 = vmul.f32 %v13, 4.0
  %v387 = vmul.f32 %v14, 4.0
  %v388 = vmul.f32 %v15, 4.0
  %v389 = vmul.f32 %v16, 4.0
  %v390 = vmul.f32 %v17, 4.0
  %v391 = vmul.f32 %v18, 4.0
  %v392 = vmul.f32 %v19, 4.0
  %v393 = vmul.f32 %v20, 4.0
  %v394 = vmul.f32 %v21, 4.0
  %v395 = vmul.f32 %v22, 4.0
  %v396 = vmul.f32 %v23, 4.0
  %413 = vrot.lane.b32.xlu0 %v381, 15
  %v414 = vpop.permute.xlu0 %413
  %415 = vrot.lane.b32.xlu0 %v382, 15
  %v416 = vpop.permute.xlu0 %415
  %417 = vrot.lane.b32.xlu0 %v383, 15
  %v418 = vpop.permute.xlu0 %417
  %419 = vrot.lane.b32.xlu0 %v384, 15
  %v420 = vpop.permute.xlu0 %419
  %421 = vrot.lane.b32.xlu0 %v385, 15
  %v422 = vpop.permute.xlu0 %421
  %423 = vrot.lane.b32.xlu0 %v386, 15
  %v424 = vpop.permute.xlu0 %423
  %425 = vrot.lane.b32.xlu0 %v387, 15
  %v426 = vpop.permute.xlu0 %425
  %427 = vrot.lane.b32.xlu0 %v388, 15
  %v428 = vpop.permute.xlu0 %427
  %429 = vrot.lane.b32.xlu0 %v389, 15
  %v430 = vpop.permute.xlu0 %429
  %431 = vrot.lane.b32.xlu0 %v390, 15
  %v432 = vpop.permute.xlu0 %431
  %433 = vrot.lane.b32.xlu0 %v391, 15
  %v434 = vpop.permute.xlu0 %433
  %435 = vrot.lane.b32.xlu0 %v392, 15
  %v436 = vpop.permute.xlu0 %435
  %437 = vrot.lane.b32.xlu0 %v393, 15
  %v438 = vpop.permute.xlu0 %437
  %439 = vrot.lane.b32.xlu0 %v394, 15
  %v440 = vpop.permute.xlu0 %439
  %441 = vrot.lane.b32.xlu0 %v395, 15
  %v442 = vpop.permute.xlu0 %441
  %443 = vrot.lane.b32.xlu0 %v396, 15
  %v444 = vpop.permute.xlu0 %443
  %v461 = vadd.f32 %v365, %v414
  %v462 = vadd.f32 %v366, %v416
  %v463 = vadd.f32 %v367, %v418
  %v464 = vadd.f32 %v368, %v420
  %v465 = vadd.f32 %v369, %v422
  %v466 = vadd.f32 %v370, %v424
  %v467 = vadd.f32 %v371, %v426
  %v468 = vadd.f32 %v372, %v428
  %v469 = vadd.f32 %v373, %v430
  %v470 = vadd.f32 %v374, %v432
  %v471 = vadd.f32 %v375, %v434
  %v472 = vadd.f32 %v376, %v436
  %v473 = vadd.f32 %v377, %v438
  %v474 = vadd.f32 %v378, %v440
  %v475 = vadd.f32 %v379, %v442
  %v476 = vadd.f32 %v380, %v444
  %v477 = vmul.f32 %v461, 0.07692308
  %v478 = vmul.f32 %v462, 0.07692308
  %v479 = vmul.f32 %v463, 0.07692308
  %v480 = vmul.f32 %v464, 0.07692308
  %v481 = vmul.f32 %v465, 0.07692308
  %v482 = vmul.f32 %v466, 0.07692308
  %v483 = vmul.f32 %v467, 0.07692308
  %v484 = vmul.f32 %v468, 0.07692308
  %v485 = vmul.f32 %v469, 0.07692308
  %v486 = vmul.f32 %v470, 0.07692308
  %v487 = vmul.f32 %v471, 0.07692308
  %v488 = vmul.f32 %v472, 0.07692308
  %v489 = vmul.f32 %v473, 0.07692308
  %v490 = vmul.f32 %v474, 0.07692308
  %v491 = vmul.f32 %v475, 0.07692308
  %v492 = vmul.f32 %v476, 0.07692308
  %v493 = vadd.s32 %v41, 8
  %v494 = vadd.s32 %v41, 16
  %v495 = vadd.s32 %v41, 24
  %v496 = vadd.s32 %v41, 32
  %v497 = vadd.s32 %v41, 40
  %v498 = vadd.s32 %v41, 48
  %v499 = vadd.s32 %v41, 56
  %v500 = vadd.s32 %v41, 64
  %v501 = vadd.s32 %v41, 72
  %v502 = vadd.s32 %v41, 80
  %v503 = vadd.s32 %v41, 88
  %v504 = vadd.s32 %v41, 96
  %v505 = vadd.s32 %v41, 104
  %v506 = vadd.s32 %v41, 112
  %v507 = vadd.s32 %v41, 120
  %vm508 = vcmp.lt.s32.totalorder %v41, 0
  %v509 = vsub.s32 0, %v41
  %v510 = vsel %vm508, %v509, %v41
  %v511 = vshrl.u32 %v510, 4
  %v512 = vand.u32 %v510, 15
  %v513 = vsub.s32 0, %v512
  %v514 = vsel %vm508, %v513, %v512
  %vm515 = vcmp.lt.s32.totalorder %v493, 0
  %v516 = vsub.s32 0, %v493
  %v517 = vsel %vm515, %v516, %v493
  %v518 = vshrl.u32 %v517, 4
  %v519 = vand.u32 %v517, 15
  %v520 = vsub.s32 0, %v519
  %v521 = vsel %vm515, %v520, %v519
  %vm522 = vcmp.lt.s32.totalorder %v494, 0
  %v523 = vsub.s32 0, %v494
  %v524 = vsel %vm522, %v523, %v494
  %v525 = vshrl.u32 %v524, 4
  %v526 = vand.u32 %v524, 15
  %v527 = vsub.s32 0, %v526
  %v528 = vsel %vm522, %v527, %v526
  %vm529 = vcmp.lt.s32.totalorder %v495, 0
  %v530 = vsub.s32 0, %v495
  %v531 = vsel %vm529, %v530, %v495
  %v532 = vshrl.u32 %v531, 4
  %v533 = vand.u32 %v531, 15
  %v534 = vsub.s32 0, %v533
  %v535 = vsel %vm529, %v534, %v533
  %vm536 = vcmp.lt.s32.totalorder %v496, 0
  %v537 = vsub.s32 0, %v496
  %v538 = vsel %vm536, %v537, %v496
  %v539 = vshrl.u32 %v538, 4
  %v540 = vand.u32 %v538, 15
  %v541 = vsub.s32 0, %v540
  %v542 = vsel %vm536, %v541, %v540
  %vm543 = vcmp.lt.s32.totalorder %v497, 0
  %v544 = vsub.s32 0, %v497
  %v545 = vsel %vm543, %v544, %v497
  %v546 = vshrl.u32 %v545, 4
  %v547 = vand.u32 %v545, 15
  %v548 = vsub.s32 0, %v547
  %v549 = vsel %vm543, %v548, %v547
  %vm550 = vcmp.lt.s32.totalorder %v498, 0
  %v551 = vsub.s32 0, %v498
  %v552 = vsel %vm550, %v551, %v498
  %v553 = vshrl.u32 %v552, 4
  %v554 = vand.u32 %v552, 15
  %v555 = vsub.s32 0, %v554
  %v556 = vsel %vm550, %v555, %v554
  %vm557 = vcmp.lt.s32.totalorder %v499, 0
  %v558 = vsub.s32 0, %v499
  %v559 = vsel %vm557, %v558, %v499
  %v560 = vshrl.u32 %v559, 4
  %v561 = vand.u32 %v559, 15
  %v562 = vsub.s32 0, %v561
  %v563 = vsel %vm557, %v562, %v561
  %vm564 = vcmp.lt.s32.totalorder %v500, 0
  %v565 = vsub.s32 0, %v500
  %v566 = vsel %vm564, %v565, %v500
  %v567 = vshrl.u32 %v566, 4
  %v568 = vand.u32 %v566, 15
  %v569 = vsub.s32 0, %v568
  %v570 = vsel %vm564, %v569, %v568
  %vm571 = vcmp.lt.s32.totalorder %v501, 0
  %v572 = vsub.s32 0, %v501
  %v573 = vsel %vm571, %v572, %v501
  %v574 = vshrl.u32 %v573, 4
  %v575 = vand.u32 %v573, 15
  %v576 = vsub.s32 0, %v575
  %v577 = vsel %vm571, %v576, %v575
  %vm578 = vcmp.lt.s32.totalorder %v502, 0
  %v579 = vsub.s32 0, %v502
  %v580 = vsel %vm578, %v579, %v502
  %v581 = vshrl.u32 %v580, 4
  %v582 = vand.u32 %v580, 15
  %v583 = vsub.s32 0, %v582
  %v584 = vsel %vm578, %v583, %v582
  %vm585 = vcmp.lt.s32.totalorder %v503, 0
  %v586 = vsub.s32 0, %v503
  %v587 = vsel %vm585, %v586, %v503
  %v588 = vshrl.u32 %v587, 4
  %v589 = vand.u32 %v587, 15
  %v590 = vsub.s32 0, %v589
  %v591 = vsel %vm585, %v590, %v589
  %vm592 = vcmp.lt.s32.totalorder %v504, 0
  %v593 = vsub.s32 0, %v504
  %v594 = vsel %vm592, %v593, %v504
  %v595 = vshrl.u32 %v594, 4
  %v596 = vand.u32 %v594, 15
  %v597 = vsub.s32 0, %v596
  %v598 = vsel %vm592, %v597, %v596
  %vm599 = vcmp.lt.s32.totalorder %v505, 0
  %v600 = vsub.s32 0, %v505
  %v601 = vsel %vm599, %v600, %v505
  %v602 = vshrl.u32 %v601, 4
  %v603 = vand.u32 %v601, 15
  %v604 = vsub.s32 0, %v603
  %v605 = vsel %vm599, %v604, %v603
  %vm606 = vcmp.lt.s32.totalorder %v506, 0
  %v607 = vsub.s32 0, %v506
  %v608 = vsel %vm606, %v607, %v506
  %v609 = vshrl.u32 %v608, 4
  %v610 = vand.u32 %v608, 15
  %v611 = vsub.s32 0, %v610
  %v612 = vsel %vm606, %v611, %v610
  %vm613 = vcmp.lt.s32.totalorder %v507, 0
  %v614 = vsub.s32 0, %v507
  %v615 = vsel %vm613, %v614, %v507
  %v616 = vshrl.u32 %v615, 4
  %v617 = vand.u32 %v615, 15
  %v618 = vsub.s32 0, %v617
  %v619 = vsel %vm613, %v618, %v617
  %vm620 = vcmp.ne.s32.totalorder %v514, 0
  %vm621 = vcmp.ne.s32.totalorder %v521, 0
  %vm622 = vcmp.ne.s32.totalorder %v528, 0
  %vm623 = vcmp.ne.s32.totalorder %v535, 0
  %vm624 = vcmp.ne.s32.totalorder %v542, 0
  %vm625 = vcmp.ne.s32.totalorder %v549, 0
  %vm626 = vcmp.ne.s32.totalorder %v556, 0
  %vm627 = vcmp.ne.s32.totalorder %v563, 0
  %vm628 = vcmp.ne.s32.totalorder %v570, 0
  %vm629 = vcmp.ne.s32.totalorder %v577, 0
  %vm630 = vcmp.ne.s32.totalorder %v584, 0
  %vm631 = vcmp.ne.s32.totalorder %v591, 0
  %vm632 = vcmp.ne.s32.totalorder %v598, 0
  %vm633 = vcmp.ne.s32.totalorder %v605, 0
  %vm634 = vcmp.ne.s32.totalorder %v612, 0
  %vm635 = vcmp.ne.s32.totalorder %v619, 0
  %vm636 = vcmp.lt.s32.totalorder %v514, 0
  %vm637 = vcmp.lt.s32.totalorder %v521, 0
  %vm638 = vcmp.lt.s32.totalorder %v528, 0
  %vm639 = vcmp.lt.s32.totalorder %v535, 0
  %vm640 = vcmp.lt.s32.totalorder %v542, 0
  %vm641 = vcmp.lt.s32.totalorder %v549, 0
  %vm642 = vcmp.lt.s32.totalorder %v556, 0
  %vm643 = vcmp.lt.s32.totalorder %v563, 0
  %vm644 = vcmp.lt.s32.totalorder %v570, 0
  %vm645 = vcmp.lt.s32.totalorder %v577, 0
  %vm646 = vcmp.lt.s32.totalorder %v584, 0
  %vm647 = vcmp.lt.s32.totalorder %v591, 0
  %vm648 = vcmp.lt.s32.totalorder %v598, 0
  %vm649 = vcmp.lt.s32.totalorder %v605, 0
  %vm650 = vcmp.lt.s32.totalorder %v612, 0
  %vm651 = vcmp.lt.s32.totalorder %v619, 0
  %vm652 = vmand %vm636, %vm620
  %vm653 = vmand %vm637, %vm621
  %vm654 = vmand %vm638, %vm622
  %vm655 = vmand %vm639, %vm623
  %vm656 = vmand %vm640, %vm624
  %vm657 = vmand %vm641, %vm625
  %vm658 = vmand %vm642, %vm626
  %vm659 = vmand %vm643, %vm627
  %vm660 = vmand %vm644, %vm628
  %vm661 = vmand %vm645, %vm629
  %vm662 = vmand %vm646, %vm630
  %vm663 = vmand %vm647, %vm631
  %vm664 = vmand %vm648, %vm632
  %vm665 = vmand %vm649, %vm633
  %vm666 = vmand %vm650, %vm634
  %vm667 = vmand %vm651, %vm635
  %v668 = vadd.s32 %v514, 16
  %v669 = vadd.s32 %v521, 16
  %v670 = vadd.s32 %v528, 16
  %v671 = vadd.s32 %v535, 16
  %v672 = vadd.s32 %v542, 16
  %v673 = vadd.s32 %v549, 16
  %v674 = vadd.s32 %v556, 16
  %v675 = vadd.s32 %v563, 16
  %v676 = vadd.s32 %v570, 16
  %v677 = vadd.s32 %v577, 16
  %v678 = vadd.s32 %v584, 16
  %v679 = vadd.s32 %v591, 16
  %v680 = vadd.s32 %v598, 16
  %v681 = vadd.s32 %v605, 16
  %v682 = vadd.s32 %v612, 16
  %v683 = vadd.s32 %v619, 16
  %v684 = vsel %vm652, %v668, %v514
  %v685 = vsel %vm653, %v669, %v521
  %v686 = vsel %vm654, %v670, %v528
  %v687 = vsel %vm655, %v671, %v535
  %v688 = vsel %vm656, %v672, %v542
  %v689 = vsel %vm657, %v673, %v549
  %v690 = vsel %vm658, %v674, %v556
  %v691 = vsel %vm659, %v675, %v563
  %v692 = vsel %vm660, %v676, %v570
  %v693 = vsel %vm661, %v677, %v577
  %v694 = vsel %vm662, %v678, %v584
  %v695 = vsel %vm663, %v679, %v591
  %v696 = vsel %vm664, %v680, %v598
  %v697 = vsel %vm665, %v681, %v605
  %v698 = vsel %vm666, %v682, %v612
  %v699 = vsel %vm667, %v683, %v619
  %v700 = vlaneseq
  %v701 = vand.u32 %v700, 127
  %vm702 = vcmp.ge.s32.totalorder %v684, 1
  %vm703 = vcmp.ge.s32.totalorder %v685, 1
  %vm704 = vcmp.ge.s32.totalorder %v686, 1
  %vm705 = vcmp.ge.s32.totalorder %v687, 1
  %vm706 = vcmp.ge.s32.totalorder %v688, 1
  %vm707 = vcmp.ge.s32.totalorder %v689, 1
  %vm708 = vcmp.ge.s32.totalorder %v690, 1
  %vm709 = vcmp.ge.s32.totalorder %v691, 1
  %vm710 = vcmp.ge.s32.totalorder %v692, 1
  %vm711 = vcmp.ge.s32.totalorder %v693, 1
  %vm712 = vcmp.ge.s32.totalorder %v694, 1
  %vm713 = vcmp.ge.s32.totalorder %v695, 1
  %vm714 = vcmp.ge.s32.totalorder %v696, 1
  %vm715 = vcmp.ge.s32.totalorder %v697, 1
  %vm716 = vcmp.ge.s32.totalorder %v698, 1
  %vm717 = vcmp.ge.s32.totalorder %v699, 1
  %vm718 = vcmp.le.s32.totalorder %v684, 14
  %vm719 = vcmp.le.s32.totalorder %v685, 14
  %vm720 = vcmp.le.s32.totalorder %v686, 14
  %vm721 = vcmp.le.s32.totalorder %v687, 14
  %vm722 = vcmp.le.s32.totalorder %v688, 14
  %vm723 = vcmp.le.s32.totalorder %v689, 14
  %vm724 = vcmp.le.s32.totalorder %v690, 14
  %vm725 = vcmp.le.s32.totalorder %v691, 14
  %vm726 = vcmp.le.s32.totalorder %v692, 14
  %vm727 = vcmp.le.s32.totalorder %v693, 14
  %vm728 = vcmp.le.s32.totalorder %v694, 14
  %vm729 = vcmp.le.s32.totalorder %v695, 14
  %vm730 = vcmp.le.s32.totalorder %v696, 14
  %vm731 = vcmp.le.s32.totalorder %v697, 14
  %vm732 = vcmp.le.s32.totalorder %v698, 14
  %vm733 = vcmp.le.s32.totalorder %v699, 14
  %vm734 = vmand %vm702, %vm718
  %vm735 = vmand %vm703, %vm719
  %vm736 = vmand %vm704, %vm720
  %vm737 = vmand %vm705, %vm721
  %vm738 = vmand %vm706, %vm722
  %vm739 = vmand %vm707, %vm723
  %vm740 = vmand %vm708, %vm724
  %vm741 = vmand %vm709, %vm725
  %vm742 = vmand %vm710, %vm726
  %vm743 = vmand %vm711, %vm727
  %vm744 = vmand %vm712, %vm728
  %vm745 = vmand %vm713, %vm729
  %vm746 = vmand %vm714, %vm730
  %vm747 = vmand %vm715, %vm731
  %vm748 = vmand %vm716, %vm732
  %vm749 = vmand %vm717, %vm733
  %vm750 = vcmp.ge.s32.totalorder %v701, 1
  %vm751 = vmand %vm734, %vm750
  %vm752 = vmand %vm735, %vm750
  %vm753 = vmand %vm736, %vm750
  %vm754 = vmand %vm737, %vm750
  %vm755 = vmand %vm738, %vm750
  %vm756 = vmand %vm739, %vm750
  %vm757 = vmand %vm740, %vm750
  %vm758 = vmand %vm741, %vm750
  %vm759 = vmand %vm742, %vm750
  %vm760 = vmand %vm743, %vm750
  %vm761 = vmand %vm744, %vm750
  %vm762 = vmand %vm745, %vm750
  %vm763 = vmand %vm746, %vm750
  %vm764 = vmand %vm747, %vm750
  %vm765 = vmand %vm748, %vm750
  %vm766 = vmand %vm749, %vm750
  %vm767 = vcmp.le.s32.totalorder %v701, 14
  %vm768 = vmand %vm751, %vm767
  %vm769 = vmand %vm752, %vm767
  %vm770 = vmand %vm753, %vm767
  %vm771 = vmand %vm754, %vm767
  %vm772 = vmand %vm755, %vm767
  %vm773 = vmand %vm756, %vm767
  %vm774 = vmand %vm757, %vm767
  %vm775 = vmand %vm758, %vm767
  %vm776 = vmand %vm759, %vm767
  %vm777 = vmand %vm760, %vm767
  %vm778 = vmand %vm761, %vm767
  %vm779 = vmand %vm762, %vm767
  %vm780 = vmand %vm763, %vm767
  %vm781 = vmand %vm764, %vm767
  %vm782 = vmand %vm765, %vm767
  %vm783 = vmand %vm766, %vm767
  %800 = vrot.lane.b32.xlu0 %v477, 113
  %v801 = vpop.permute.xlu0 %800
  %802 = vrot.lane.b32.xlu0 %v478, 113
  %v803 = vpop.permute.xlu0 %802
  %804 = vrot.lane.b32.xlu0 %v479, 113
  %v805 = vpop.permute.xlu0 %804
  %806 = vrot.lane.b32.xlu0 %v480, 113
  %v807 = vpop.permute.xlu0 %806
  %808 = vrot.lane.b32.xlu0 %v481, 113
  %v809 = vpop.permute.xlu0 %808
  %810 = vrot.lane.b32.xlu0 %v482, 113
  %v811 = vpop.permute.xlu0 %810
  %812 = vrot.lane.b32.xlu0 %v483, 113
  %v813 = vpop.permute.xlu0 %812
  %814 = vrot.lane.b32.xlu0 %v484, 113
  %v815 = vpop.permute.xlu0 %814
  %816 = vrot.lane.b32.xlu0 %v485, 113
  %v817 = vpop.permute.xlu0 %816
  %818 = vrot.lane.b32.xlu0 %v486, 113
  %v819 = vpop.permute.xlu0 %818
  %820 = vrot.lane.b32.xlu0 %v487, 113
  %v821 = vpop.permute.xlu0 %820
  %822 = vrot.lane.b32.xlu0 %v488, 113
  %v823 = vpop.permute.xlu0 %822
  %824 = vrot.lane.b32.xlu0 %v489, 113
  %v825 = vpop.permute.xlu0 %824
  %826 = vrot.lane.b32.xlu0 %v490, 113
  %v827 = vpop.permute.xlu0 %826
  %828 = vrot.lane.b32.xlu0 %v491, 113
  %v829 = vpop.permute.xlu0 %828
  %830 = vrot.lane.b32.xlu0 %v492, 113
  %v831 = vpop.permute.xlu0 %830
  %v848 = vsel %vm768, %v801, %v8
  %v849 = vsel %vm769, %v803, %v9
  %v850 = vsel %vm770, %v805, %v10
  %v851 = vsel %vm771, %v807, %v11
  %v852 = vsel %vm772, %v809, %v12
  %v853 = vsel %vm773, %v811, %v13
  %v854 = vsel %vm774, %v813, %v14
  %v855 = vsel %vm775, %v815, %v15
  %v856 = vsel %vm776, %v817, %v16
  %v857 = vsel %vm777, %v819, %v17
  %v858 = vsel %vm778, %v821, %v18
  %v859 = vsel %vm779, %v823, %v19
  %v860 = vsel %vm780, %v825, %v20
  %v861 = vsel %vm781, %v827, %v21
  %v862 = vsel %vm782, %v829, %v22
  %v863 = vsel %vm783, %v831, %v23
  %v864 = vmul.f32 %v8, 1.7
  %v865 = vmul.f32 %v9, 1.7
  %v866 = vmul.f32 %v10, 1.7
  %v867 = vmul.f32 %v11, 1.7
  %v868 = vmul.f32 %v12, 1.7
  %v869 = vmul.f32 %v13, 1.7
  %v870 = vmul.f32 %v14, 1.7
  %v871 = vmul.f32 %v15, 1.7
  %v872 = vmul.f32 %v16, 1.7
  %v873 = vmul.f32 %v17, 1.7
  %v874 = vmul.f32 %v18, 1.7
  %v875 = vmul.f32 %v19, 1.7
  %v876 = vmul.f32 %v20, 1.7
  %v877 = vmul.f32 %v21, 1.7
  %v878 = vmul.f32 %v22, 1.7
  %v879 = vmul.f32 %v23, 1.7
  %v880 = vmul.f32 %v848, -0.70000005
  %v881 = vmul.f32 %v849, -0.70000005
  %v882 = vmul.f32 %v850, -0.70000005
  %v883 = vmul.f32 %v851, -0.70000005
  %v884 = vmul.f32 %v852, -0.70000005
  %v885 = vmul.f32 %v853, -0.70000005
  %v886 = vmul.f32 %v854, -0.70000005
  %v887 = vmul.f32 %v855, -0.70000005
  %v888 = vmul.f32 %v856, -0.70000005
  %v889 = vmul.f32 %v857, -0.70000005
  %v890 = vmul.f32 %v858, -0.70000005
  %v891 = vmul.f32 %v859, -0.70000005
  %v892 = vmul.f32 %v860, -0.70000005
  %v893 = vmul.f32 %v861, -0.70000005
  %v894 = vmul.f32 %v862, -0.70000005
  %v895 = vmul.f32 %v863, -0.70000005
  %v896 = vadd.f32 %v864, %v880
  %v897 = vadd.f32 %v865, %v881
  %v898 = vadd.f32 %v866, %v882
  %v899 = vadd.f32 %v867, %v883
  %v900 = vadd.f32 %v868, %v884
  %v901 = vadd.f32 %v869, %v885
  %v902 = vadd.f32 %v870, %v886
  %v903 = vadd.f32 %v871, %v887
  %v904 = vadd.f32 %v872, %v888
  %v905 = vadd.f32 %v873, %v889
  %v906 = vadd.f32 %v874, %v890
  %v907 = vadd.f32 %v875, %v891
  %v908 = vadd.f32 %v876, %v892
  %v909 = vadd.f32 %v877, %v893
  %v910 = vadd.f32 %v878, %v894
  %v911 = vadd.f32 %v879, %v895
  %v912 = vmax.f32 %v896, 0.0
  %v913 = vmax.f32 %v897, 0.0
  %v914 = vmax.f32 %v898, 0.0
  %v915 = vmax.f32 %v899, 0.0
  %v916 = vmax.f32 %v900, 0.0
  %v917 = vmax.f32 %v901, 0.0
  %v918 = vmax.f32 %v902, 0.0
  %v919 = vmax.f32 %v903, 0.0
  %v920 = vmax.f32 %v904, 0.0
  %v921 = vmax.f32 %v905, 0.0
  %v922 = vmax.f32 %v906, 0.0
  %v923 = vmax.f32 %v907, 0.0
  %v924 = vmax.f32 %v908, 0.0
  %v925 = vmax.f32 %v909, 0.0
  %v926 = vmax.f32 %v910, 0.0
  %v927 = vmax.f32 %v911, 0.0
  %v928 = vmin.f32 %v912, 1.0
  %v929 = vmin.f32 %v913, 1.0
  %v930 = vmin.f32 %v914, 1.0
  %v931 = vmin.f32 %v915, 1.0
  %v932 = vmin.f32 %v916, 1.0
  %v933 = vmin.f32 %v917, 1.0
  %v934 = vmin.f32 %v918, 1.0
  %v935 = vmin.f32 %v919, 1.0
  %v936 = vmin.f32 %v920, 1.0
  %v937 = vmin.f32 %v921, 1.0
  %v938 = vmin.f32 %v922, 1.0
  %v939 = vmin.f32 %v923, 1.0
  %v940 = vmin.f32 %v924, 1.0
  %v941 = vmin.f32 %v925, 1.0
  %v942 = vmin.f32 %v926, 1.0
  %v943 = vmin.f32 %v927, 1.0
  %vm944 = vcmask 130048
  %945 = vst.msk [vmem:[%s1] sm:$0xff] %vm944, %v928
  %946 = vst.msk [vmem:[%s1 + $0x8] sm:$0xff] %vm944, %v929
  %947 = vst.msk [vmem:[%s1 + $0x10] sm:$0xff] %vm944, %v930
  %948 = vst.msk [vmem:[%s1 + $0x18] sm:$0xff] %vm944, %v931
  %949 = vst.msk [vmem:[%s1 + $0x20] sm:$0xff] %vm944, %v932
  %950 = vst.msk [vmem:[%s1 + $0x28] sm:$0xff] %vm944, %v933
  %951 = vst.msk [vmem:[%s1 + $0x30] sm:$0xff] %vm944, %v934
  %952 = vst.msk [vmem:[%s1 + $0x38] sm:$0xff] %vm944, %v935
  %953 = vst.msk [vmem:[%s1 + $0x40] sm:$0xff] %vm944, %v936
  %954 = vst.msk [vmem:[%s1 + $0x48] sm:$0xff] %vm944, %v937
  %955 = vst.msk [vmem:[%s1 + $0x50] sm:$0xff] %vm944, %v938
  %956 = vst.msk [vmem:[%s1 + $0x58] sm:$0xff] %vm944, %v939
  %957 = vst.msk [vmem:[%s1 + $0x60] sm:$0xff] %vm944, %v940
  %958 = vst.msk [vmem:[%s1 + $0x68] sm:$0xff] %vm944, %v941
  %959 = vst.msk [vmem:[%s1 + $0x70] sm:$0xff] %vm944, %v942
  %960 = vst.msk [vmem:[%s1 + $0x78] sm:$0xff] %vm944, %v943
  // Predicated region
  $region6: #{_adjust_sharpness_call.1} parent=0 // pred_check
    _
  $region7: #{_adjust_sharpness_call.1} parent=0 // pred_check_branch
    %962 = sbr.rel (0) target = $region9
  $region8: #{_adjust_sharpness_call.1} parent=0 // pred_region
    _
  $region9: #{_adjust_sharpness_call.1} parent=0 // pred_fallthru
    _
  // Predicated region
  $region10: #{_adjust_sharpness_call.1} parent=0 // pred_check
    _
  $region11: #{_adjust_sharpness_call.1} parent=0 // pred_check_branch
    %964 = sbr.rel (0) target = $region13
  $region12: #{_adjust_sharpness_call.1} parent=0 // pred_region
    _
  $region13: #{_adjust_sharpness_call.1} parent=0 // pred_fallthru
    _

</llo_original>
